<compile_context>
chip_gen: v6e
topology: v6e:2x2x1
jax: 0.10.0
libtpu: 0.0.40
codegen_flags: <defaults>
</compile_context>

<pallas_src>
import jax
import jax.numpy as jnp
from jax.experimental import pallas as pl
from jax.experimental.pallas import tpu as pltpu


def _round_up(n, m):
    return ((n + m - 1) // m) * m


def critic_kernel(x_ref, w1_ref, b1_ref, w2_ref, b2_ref, o_ref):
    # x_ref:  (S, TB)   batch on lanes
    # w1_ref: (H, S)    PyTorch-native (out_features, in_features)
    # b1_ref: (H, 1)    column bias
    # w2_ref: (H, 1)    fc2 weight as a column
    # b2_ref: (1,)      SMEM scalar
    # o_ref:  (1, TB)   lane-dense output row

    # fc1 on the MXU (K = S), f32 accumulation; bias + ReLU on the VPU.
    h = jnp.dot(w1_ref[...], x_ref[...], preferred_element_type=jnp.float32)  # (H, TB)
    h = jnp.maximum(h + b1_ref[...], 0.0)

    # fc2 (H -> 1): VPU multiply + sublane reduce; result is already lane-dense (1, TB).
    v = jnp.sum(h * w2_ref[...], axis=0, keepdims=True) + b2_ref[0]           # (1, TB)

    o_ref[...] = v.astype(o_ref.dtype)


def critic_forward(x, w1, b1, w2, b2, *, block_b=8192):
    """x: (B, S) f32; w1: (H, S); b1: (H,); w2: (H, 1); b2: (1,).  Returns (B, 1)."""
    B, S = x.shape
    H = w1.shape[0]

    # Batch tile: multiple of 128 (lane dim), capped at block_b.
    TB = min(block_b, _round_up(max(B, 1), 128))
    num_tiles = pl.cdiv(B, TB)

    # Batch-on-lanes layout.  (Tiny wrapper transpose: B*S*4 bytes.)
    x_t = x.T.astype(jnp.float32)                      # (S, B)
    b1_col = b1.reshape(H, 1).astype(jnp.float32)      # (H, 1)
    w2_col = w2.reshape(H, 1).astype(jnp.float32)      # (H, 1)
    b2_s = b2.reshape(1).astype(jnp.float32)           # (1,) SMEM scalar

    out_row = pl.pallas_call(
        critic_kernel,
        out_shape=jax.ShapeDtypeStruct((1, B), jnp.float32),
        grid=(num_tiles,),
        in_specs=[
            pl.BlockSpec((S, TB), lambda i: (0, i)),   # stream x tiles (batch on lanes)
            pl.BlockSpec((H, S), lambda i: (0, 0)),    # w1 resident
            pl.BlockSpec((H, 1), lambda i: (0, 0)),    # b1 resident (column)
            pl.BlockSpec((H, 1), lambda i: (0, 0)),    # w2 resident (column)
            pl.BlockSpec(memory_space=pltpu.MemorySpace.SMEM),  # b2 scalar
        ],
        out_specs=pl.BlockSpec((1, TB), lambda i: (0, i)),
        compiler_params=pltpu.CompilerParams(
            dimension_semantics=("parallel",),         # megacore-shardable batch axis
        ),
    )(x_t, w1, b1_col, w2_col, b2_s)

    # (1, B) lane-dense row -> (B, 1) to match the PyTorch module's output shape.
    return out_row.reshape(B, 1)


def critic_reference(x, w1, b1, w2, b2):
    h = jnp.maximum(x @ w1.T + b1, 0.0)
    return h @ w2 + b2


def init_params(key, state_size, hidden=128, out=1):
    """Deterministic init mimicking PyTorch nn.Linear default (uniform +/-1/sqrt(fan_in))."""
    k1, k2, k3, k4 = jax.random.split(key, 4)
    bound1 = 1.0 / jnp.sqrt(jnp.float32(state_size))
    bound2 = 1.0 / jnp.sqrt(jnp.float32(hidden))
    # w1 in PyTorch-native (out_features, in_features) layout; w2 as (in, out) column.
    w1 = jax.random.uniform(k1, (hidden, state_size), jnp.float32, -bound1, bound1)
    b1 = jax.random.uniform(k2, (hidden,), jnp.float32, -bound1, bound1)
    w2 = jax.random.uniform(k3, (hidden, out), jnp.float32, -bound2, bound2)
    b2 = jax.random.uniform(k4, (out,), jnp.float32, -bound2, bound2)
    return w1, b1, w2, b2


if __name__ == "__main__":
    key = jax.random.PRNGKey(0)
    kx, kp, kx2 = jax.random.split(key, 3)

    state_size = 4  # CartPole observation size
    w1, b1, w2, b2 = init_params(kp, state_size)

    # Small CartPole-style batch (single tile, TB > B partial-block path).
    x_small = jax.random.normal(kx, (8, state_size), jnp.float32)
    out_small = jax.block_until_ready(critic_forward(x_small, w1, b1, w2, b2))
    ref_small = critic_reference(x_small, w1, b1, w2, b2)
    assert out_small.shape == (8, 1)
    assert jnp.allclose(out_small, ref_small, atol=1e-5, rtol=1e-4)

    # Multi-tile path with a ragged tail (exercises grid, weight residency, edge masking).
    x_big = jax.random.normal(kx2, (300, state_size), jnp.float32)
    out_big = jax.block_until_ready(critic_forward(x_big, w1, b1, w2, b2, block_b=256))
    ref_big = critic_reference(x_big, w1, b1, w2, b2)
    assert out_big.shape == (300, 1)
    assert jnp.allclose(out_big, ref_big, atol=1e-5, rtol=1e-4)

    print("KERNEL_OK")
</pallas_src>

<mosaic_0001>
module attributes {stable_mosaic.version = 11 : i64} {
  func.func @critic_kernel(%arg0: i32, %arg1: memref<4x128xf32, #tpu.memory_space<vmem>>, %arg2: memref<128x4xf32, #tpu.memory_space<vmem>>, %arg3: memref<128x1xf32, #tpu.memory_space<vmem>>, %arg4: memref<128x1xf32, #tpu.memory_space<vmem>>, %arg5: memref<1xf32, #tpu.memory_space<smem>>, %arg6: memref<1x128xf32, #tpu.memory_space<vmem>>) attributes {dimension_semantics = [#tpu.dimension_semantics<parallel>], iteration_bounds = array<i64: 1>, scalar_prefetch = 0 : i64, scratch_operands = 0 : i64, tpu.core_type = #tpu.core_type<tc>, window_params = [{transform_indices = @transform_0, window_bounds = array<i64: 4, 128>}, {pipeline_mode = #tpu.pipeline_mode<synchronous>, transform_indices = @transform_1, window_bounds = array<i64: 128, 4>}, {pipeline_mode = #tpu.pipeline_mode<synchronous>, transform_indices = @transform_2, window_bounds = array<i64: 128, 1>}, {pipeline_mode = #tpu.pipeline_mode<synchronous>, transform_indices = @transform_3, window_bounds = array<i64: 128, 1>}, {transform_indices = @transform_4, window_bounds = array<i64: 1>}, {transform_indices = @transform_5, window_bounds = array<i64: 1, 128>}]} {
    %c0 = arith.constant 0 : index
    %c0_0 = arith.constant 0 : index
    %0 = vector.load %arg2[%c0, %c0_0] : memref<128x4xf32, #tpu.memory_space<vmem>>, vector<128x4xf32>
    %c0_1 = arith.constant 0 : index
    %c0_2 = arith.constant 0 : index
    %1 = vector.load %arg1[%c0_1, %c0_2] : memref<4x128xf32, #tpu.memory_space<vmem>>, vector<4x128xf32>
    %cst = arith.constant dense<0.000000e+00> : vector<128x128xf32>
    %2 = tpu.matmul %0, %1, %cst {dimension_numbers = #tpu.dot_dimension_numbers<[1], [0], [0], [1], [0, 0, 1, 1], [], []>} : vector<128x4xf32>, vector<4x128xf32>, vector<128x128xf32> -> vector<128x128xf32>
    %c0_3 = arith.constant 0 : index
    %c0_4 = arith.constant 0 : index
    %3 = vector.load %arg3[%c0_3, %c0_4] : memref<128x1xf32, #tpu.memory_space<vmem>>, vector<128x1xf32>
    %4 = vector.broadcast %3 : vector<128x1xf32> to vector<128x128xf32>
    %5 = arith.addf %2, %4 : vector<128x128xf32>
    %cst_5 = arith.constant 0.000000e+00 : f32
    %6 = vector.broadcast %cst_5 : f32 to vector<128x128xf32>
    %7 = arith.maximumf %5, %6 : vector<128x128xf32>
    %c0_6 = arith.constant 0 : index
    %c0_7 = arith.constant 0 : index
    %8 = vector.load %arg4[%c0_6, %c0_7] : memref<128x1xf32, #tpu.memory_space<vmem>>, vector<128x1xf32>
    %9 = vector.broadcast %8 : vector<128x1xf32> to vector<128x128xf32>
    %10 = arith.mulf %7, %9 : vector<128x128xf32>
    %cst_8 = arith.constant dense<0.000000e+00> : vector<128xf32>
    %11 = vector.multi_reduction <add>, %10, %cst_8 [0] : vector<128x128xf32> to vector<128xf32>
    %12 = vector.shape_cast %11 : vector<128xf32> to vector<1x128xf32>
    %c0_9 = arith.constant 0 : index
    %13 = memref.load %arg5[%c0_9] : memref<1xf32, #tpu.memory_space<smem>>
    %14 = vector.broadcast %13 : f32 to vector<1x128xf32>
    %15 = arith.addf %12, %14 : vector<1x128xf32>
    %c0_10 = arith.constant 0 : index
    %c0_11 = arith.constant 0 : index
    %16 = vector.load %arg6[%c0_10, %c0_11] : memref<1x128xf32, #tpu.memory_space<vmem>>, vector<1x128xf32>
    tpu.vector_store %arg6[%c0_10, %c0_11], %15 {strides = array<i32>} : memref<1x128xf32, #tpu.memory_space<vmem>>, vector<1x128xf32>,
    return
  }
  func.func @transform_0(%arg0: i32) -> (i32, i32) {
    %c0_i32 = arith.constant 0 : i32
    %c0_i32_0 = arith.constant 0 : i32
    return %c0_i32, %arg0 : i32, i32
  }
  func.func @transform_1(%arg0: i32) -> (i32, i32) {
    %c0_i32 = arith.constant 0 : i32
    %c0_i32_0 = arith.constant 0 : i32
    %c0_i32_1 = arith.constant 0 : i32
    return %c0_i32, %c0_i32_0 : i32, i32
  }
  func.func @transform_2(%arg0: i32) -> (i32, i32) {
    %c0_i32 = arith.constant 0 : i32
    %c0_i32_0 = arith.constant 0 : i32
    %c0_i32_1 = arith.constant 0 : i32
    return %c0_i32, %c0_i32_0 : i32, i32
  }
  func.func @transform_3(%arg0: i32) -> (i32, i32) {
    %c0_i32 = arith.constant 0 : i32
    %c0_i32_0 = arith.constant 0 : i32
    %c0_i32_1 = arith.constant 0 : i32
    return %c0_i32, %c0_i32_0 : i32, i32
  }
  func.func @transform_4(%arg0: i32) -> i32 {
    %c0_i32 = arith.constant 0 : i32
    %c0_i32_0 = arith.constant 0 : i32
    return %c0_i32 : i32
  }
  func.func @transform_5(%arg0: i32) -> (i32, i32) {
    %c0_i32 = arith.constant 0 : i32
    %c0_i32_0 = arith.constant 0 : i32
    return %c0_i32, %arg0 : i32, i32
  }
}

</mosaic_0001>

<llo_original>
// kernel: tpu_custom_call.1
$region0: #{tpu_custom_call.1}
  #allocation0 [shape = 'u32[]', space=smem, size = 0x4, offset = 0x4, fixed_abs, tag = 'smem constant byte address 0x4 - core index']
  #allocation1 [shape = 'u32[144,128]{1,0:T(1,128)}', space=vmem, size = 0x12000, scoped, tag = 'internal scratch']
  #allocation2 [shape = 'f32[1]{0:T(128)S(6)}', space=smem, size = 0x200, scoped, tag = 'scoped memory for tpu_custom_call.1']
  %s0 = inlined_call_operand.vmem [shape: f32[4,8], index: 0, kind: input, shape index: {}]
  %s1 = inlined_call_operand.vmem [shape: f32[128,4], index: 1, kind: input, shape index: {}]
  %s2 = inlined_call_operand.vmem [shape: f32[128,1], index: 2, kind: input, shape index: {}]
  %s3 = inlined_call_operand.vmem [shape: f32[128,1], index: 3, kind: input, shape index: {}]
  %s4 = inlined_call_operand.<no memory space> [shape: f32[1], index: 4, kind: input, shape index: {}]
  %s5 = inlined_call_operand.hbm [shape: f32[1,8], index: 5, kind: output, shape index: {}]
  %s6 = sld [smem:[#allocation0]]
  $region30: #{tpu_custom_call.1} parent=0
    _
  %s8 = ssub.s32 1, %s6
  %s9 = scalar_select 0, %s8, %s6
  %10 = sst [smem:[#allocation2]] %s4
  $region1: #{tpu_custom_call.1} parent=0
    #allocation3 [shape = 'u8[512]{0}', space=vmem, size = 0x400, scoped, tag = 'output window, operand 0, single buffered']
    #allocation4 [shape = 's32[1]{0}', space=sflag, size = 0x4, scoped, tag = 'scoped memory for tpu_custom_call.1']
    %11 = vsyncpa [#allocation4], 0
    // Predicated region
    $region2: #{tpu_custom_call.1} parent=1 // pred_check
      _
    $region3: #{tpu_custom_call.1} parent=1 // pred_check_branch
      %13 = sbr.rel (0) target = $region5
    $region4: #{tpu_custom_call.1} parent=1 // pred_region
      _
    $region5: #{tpu_custom_call.1} parent=1 // pred_fallthru
      _
    // Predicated region
    $region6: #{tpu_custom_call.1} parent=1 // pred_check
      _
    $region7: #{tpu_custom_call.1} parent=1 // pred_check_branch
      %15 = sbr.rel (0) target = $region9
    $region8: #{tpu_custom_call.1} parent=1 // pred_region
      _
    $region9: #{tpu_custom_call.1} parent=1 // pred_fallthru
      _
    // Predicated region
    $region10: #{tpu_custom_call.1} parent=1 // pred_check
      _
    $region11: #{tpu_custom_call.1} parent=1 // pred_check_branch
      %17 = sbr.rel (0) target = $region13
    $region12: #{tpu_custom_call.1} parent=1 // pred_region
      _
    $region13: #{tpu_custom_call.1} parent=1 // pred_fallthru
      _
    // Predicated region
    $region14: #{tpu_custom_call.1} parent=1 // pred_check
      _
    $region15: #{tpu_custom_call.1} parent=1 // pred_check_branch
      %19 = sbr.rel (0) target = $region17
    $region16: #{tpu_custom_call.1} parent=1 // pred_region
      _
    $region17: #{tpu_custom_call.1} parent=1 // pred_fallthru
      _
    // Predicated region
    $region18: #{tpu_custom_call.1} parent=1 // pred_check
      _
    $region19: #{tpu_custom_call.1} parent=1 // pred_check_branch
      %21 = sbr.rel (0) target = $region21
    $region20: #{tpu_custom_call.1} parent=1 // pred_region
      _
    $region21: #{tpu_custom_call.1} parent=1 // pred_fallthru
      _
    %v22 = vld [vmem:[%s1] sm:$0xff]
    %v23 = vld [vmem:[%s1 + $0x8] sm:$0xff]
    %v24 = vld [vmem:[%s1 + $0x10] sm:$0xff]
    %v25 = vld [vmem:[%s1 + $0x18] sm:$0xff]
    %v26 = vld [vmem:[%s1 + $0x20] sm:$0xff]
    %v27 = vld [vmem:[%s1 + $0x28] sm:$0xff]
    %v28 = vld [vmem:[%s1 + $0x30] sm:$0xff]
    %v29 = vld [vmem:[%s1 + $0x38] sm:$0xff]
    %v30 = vld [vmem:[%s1 + $0x40] sm:$0xff]
    %v31 = vld [vmem:[%s1 + $0x48] sm:$0xff]
    %v32 = vld [vmem:[%s1 + $0x50] sm:$0xff]
    %v33 = vld [vmem:[%s1 + $0x58] sm:$0xff]
    %v34 = vld [vmem:[%s1 + $0x60] sm:$0xff]
    %v35 = vld [vmem:[%s1 + $0x68] sm:$0xff]
    %v36 = vld [vmem:[%s1 + $0x70] sm:$0xff]
    %v37 = vld [vmem:[%s1 + $0x78] sm:$0xff]
    %v38 = vld [vmem:[%s0] sm:$0xf]
    %v39 = vld [vmem:[%s2] sm:$0xff]
    %v40 = vld [vmem:[%s2 + $0x8] sm:$0xff]
    %v41 = vld [vmem:[%s2 + $0x10] sm:$0xff]
    %v42 = vld [vmem:[%s2 + $0x18] sm:$0xff]
    %v43 = vld [vmem:[%s2 + $0x20] sm:$0xff]
    %v44 = vld [vmem:[%s2 + $0x28] sm:$0xff]
    %v45 = vld [vmem:[%s2 + $0x30] sm:$0xff]
    %v46 = vld [vmem:[%s2 + $0x38] sm:$0xff]
    %v47 = vld [vmem:[%s2 + $0x40] sm:$0xff]
    %v48 = vld [vmem:[%s2 + $0x48] sm:$0xff]
    %v49 = vld [vmem:[%s2 + $0x50] sm:$0xff]
    %v50 = vld [vmem:[%s2 + $0x58] sm:$0xff]
    %v51 = vld [vmem:[%s2 + $0x60] sm:$0xff]
    %v52 = vld [vmem:[%s2 + $0x68] sm:$0xff]
    %v53 = vld [vmem:[%s2 + $0x70] sm:$0xff]
    %v54 = vld [vmem:[%s2 + $0x78] sm:$0xff]
    %56 = vset.pattern.permute.xlu0 0
    %57 = vperm.xlu0 %56, %v39
    %v58 = vpop.permute.xlu0 %57
    %61 = vset.pattern.permute.xlu0 0
    %62 = vperm.xlu0 %61, %v40
    %v63 = vpop.permute.xlu0 %62
    %66 = vset.pattern.permute.xlu0 0
    %67 = vperm.xlu0 %66, %v41
    %v68 = vpop.permute.xlu0 %67
    %71 = vset.pattern.permute.xlu0 0
    %72 = vperm.xlu0 %71, %v42
    %v73 = vpop.permute.xlu0 %72
    %76 = vset.pattern.permute.xlu0 0
    %77 = vperm.xlu0 %76, %v43
    %v78 = vpop.permute.xlu0 %77
    %81 = vset.pattern.permute.xlu0 0
    %82 = vperm.xlu0 %81, %v44
    %v83 = vpop.permute.xlu0 %82
    %86 = vset.pattern.permute.xlu0 0
    %87 = vperm.xlu0 %86, %v45
    %v88 = vpop.permute.xlu0 %87
    %91 = vset.pattern.permute.xlu0 0
    %92 = vperm.xlu0 %91, %v46
    %v93 = vpop.permute.xlu0 %92
    %96 = vset.pattern.permute.xlu0 0
    %97 = vperm.xlu0 %96, %v47
    %v98 = vpop.permute.xlu0 %97
    %101 = vset.pattern.permute.xlu0 0
    %102 = vperm.xlu0 %101, %v48
    %v103 = vpop.permute.xlu0 %102
    %106 = vset.pattern.permute.xlu0 0
    %107 = vperm.xlu0 %106, %v49
    %v108 = vpop.permute.xlu0 %107
    %111 = vset.pattern.permute.xlu0 0
    %112 = vperm.xlu0 %111, %v50
    %v113 = vpop.permute.xlu0 %112
    %116 = vset.pattern.permute.xlu0 0
    %117 = vperm.xlu0 %116, %v51
    %v118 = vpop.permute.xlu0 %117
    %121 = vset.pattern.permute.xlu0 0
    %122 = vperm.xlu0 %121, %v52
    %v123 = vpop.permute.xlu0 %122
    %126 = vset.pattern.permute.xlu0 0
    %127 = vperm.xlu0 %126, %v53
    %v128 = vpop.permute.xlu0 %127
    %131 = vset.pattern.permute.xlu0 0
    %132 = vperm.xlu0 %131, %v54
    %v133 = vpop.permute.xlu0 %132
    %vm135 = vcmask 31744
    %v137 = vsel %vm135, %v22, 0
    %v140 = vsel %vm135, %v23, 0
    %v143 = vsel %vm135, %v24, 0
    %v146 = vsel %vm135, %v25, 0
    %v149 = vsel %vm135, %v26, 0
    %v152 = vsel %vm135, %v27, 0
    %v155 = vsel %vm135, %v28, 0
    %v158 = vsel %vm135, %v29, 0
    %v161 = vsel %vm135, %v30, 0
    %v164 = vsel %vm135, %v31, 0
    %v167 = vsel %vm135, %v32, 0
    %v170 = vsel %vm135, %v33, 0
    %v173 = vsel %vm135, %v34, 0
    %v176 = vsel %vm135, %v35, 0
    %v179 = vsel %vm135, %v36, 0
    %v182 = vsel %vm135, %v37, 0
    %vm184 = vcmask 1043456
    %v186 = vsel %vm184, %v38, 0
    %188 = vmatprep.subr.mxu0 0.0
    %189 = vmatpush1.msra.mxu0 0.0
    %190 = vmatprep.subr.mxu0 0.0
    %191 = vmatpush1.msra.mxu0 0.0
    %192 = vmatprep.subr.mxu0 0.0
    %193 = vmatpush1.msra.mxu0 0.0
    %194 = vmatprep.subr.mxu0 0.0
    %195 = vmatpush1.msra.mxu0 0.0
    %196 = vmatprep.subr.mxu0 0.0
    %197 = vmatpush1.msra.mxu0 0.0
    %198 = vmatprep.subr.mxu0 0.0
    %199 = vmatpush1.msra.mxu0 0.0
    %200 = vmatprep.subr.mxu0 0.0
    %201 = vmatpush1.msra.mxu0 0.0
    %202 = vmatprep.subr.mxu0 0.0
    %203 = vmatpush1.msra.mxu0 0.0
    %204 = vmatprep.subr.mxu0 0.0
    %205 = vmatpush1.msra.mxu0 0.0
    %206 = vmatprep.subr.mxu0 0.0
    %207 = vmatpush1.msra.mxu0 0.0
    %208 = vmatprep.subr.mxu0 0.0
    %209 = vmatpush1.msra.mxu0 0.0
    %210 = vmatprep.subr.mxu0 0.0
    %211 = vmatpush1.msra.mxu0 0.0
    %212 = vmatprep.subr.mxu0 0.0
    %213 = vmatpush1.msra.mxu0 0.0
    %214 = vmatprep.subr.mxu0 0.0
    %215 = vmatpush1.msra.mxu0 0.0
    %216 = vmatprep.subr.mxu0 0.0
    %217 = vmatpush1.msra.mxu0 0.0
    %218 = vmatprep.subr.mxu0 0.0
    %219 = vmatpush1.msra.mxu0 %v186
    %220 = vmatprep.subr.mxu0 0.0
    %221 = vmatpush2.msra.mxu0 0.0
    %222 = vmatprep.subr.mxu0 0.0
    %223 = vmatpush2.msra.mxu0 0.0
    %224 = vmatprep.subr.mxu0 0.0
    %225 = vmatpush2.msra.mxu0 0.0
    %226 = vmatprep.subr.mxu0 0.0
    %227 = vmatpush2.msra.mxu0 0.0
    %228 = vmatprep.subr.mxu0 0.0
    %229 = vmatpush2.msra.mxu0 0.0
    %230 = vmatprep.subr.mxu0 0.0
    %231 = vmatpush2.msra.mxu0 0.0
    %232 = vmatprep.subr.mxu0 0.0
    %233 = vmatpush2.msra.mxu0 0.0
    %234 = vmatprep.subr.mxu0 0.0
    %235 = vmatpush2.msra.mxu0 0.0
    %236 = vmatprep.subr.mxu0 0.0
    %237 = vmatpush2.msra.mxu0 0.0
    %238 = vmatprep.subr.mxu0 0.0
    %239 = vmatpush2.msra.mxu0 0.0
    %240 = vmatprep.subr.mxu0 0.0
    %241 = vmatpush2.msra.mxu0 0.0
    %242 = vmatprep.subr.mxu0 0.0
    %243 = vmatpush2.msra.mxu0 0.0
    %244 = vmatprep.subr.mxu0 0.0
    %245 = vmatpush2.msra.mxu0 0.0
    %246 = vmatprep.subr.mxu0 0.0
    %247 = vmatpush2.msra.mxu0 0.0
    %248 = vmatprep.subr.mxu0 0.0
    %249 = vmatpush2.msra.mxu0 0.0
    %250 = vmatprep.subr.mxu0 0.0
    %251 = vmatpush2.msra.mxu0 0.0
    %252 = vmatprep.mubr.f32.mxu0 0.0
    %253 = vmatmul.mubr.f32.gmra.mxu0 %v137
    %v254 = vpop.f32.mrf.mxu0
    %v255 = vadd.f32 %v58, %v254
    %v256 = vpop.f32.mrf.mxu0
    %257 = vmatprep.mubr.f32.mxu0 0.0
    %258 = vmatmul.mubr.f32.gmra.mxu0 %v140
    %v259 = vpop.f32.mrf.mxu0
    %v260 = vadd.f32 %v63, %v259
    %v261 = vpop.f32.mrf.mxu0
    %262 = vmatprep.mubr.f32.mxu0 0.0
    %263 = vmatmul.mubr.f32.gmra.mxu0 %v143
    %v264 = vpop.f32.mrf.mxu0
    %v265 = vadd.f32 %v68, %v264
    %v266 = vpop.f32.mrf.mxu0
    %267 = vmatprep.mubr.f32.mxu0 0.0
    %268 = vmatmul.mubr.f32.gmra.mxu0 %v146
    %v269 = vpop.f32.mrf.mxu0
    %v270 = vadd.f32 %v73, %v269
    %v271 = vpop.f32.mrf.mxu0
    %272 = vmatprep.mubr.f32.mxu0 0.0
    %273 = vmatmul.mubr.f32.gmra.mxu0 %v149
    %v274 = vpop.f32.mrf.mxu0
    %v275 = vadd.f32 %v78, %v274
    %v276 = vpop.f32.mrf.mxu0
    %277 = vmatprep.mubr.f32.mxu0 0.0
    %278 = vmatmul.mubr.f32.gmra.mxu0 %v152
    %v279 = vpop.f32.mrf.mxu0
    %v280 = vadd.f32 %v83, %v279
    %v281 = vpop.f32.mrf.mxu0
    %282 = vmatprep.mubr.f32.mxu0 0.0
    %283 = vmatmul.mubr.f32.gmra.mxu0 %v155
    %v284 = vpop.f32.mrf.mxu0
    %v285 = vadd.f32 %v88, %v284
    %v286 = vpop.f32.mrf.mxu0
    %287 = vmatprep.mubr.f32.mxu0 0.0
    %288 = vmatmul.mubr.f32.gmra.mxu0 %v158
    %v289 = vpop.f32.mrf.mxu0
    %v290 = vadd.f32 %v93, %v289
    %v291 = vpop.f32.mrf.mxu0
    %292 = vmatprep.mubr.f32.mxu0 0.0
    %293 = vmatmul.mubr.f32.gmra.mxu0 %v161
    %v294 = vpop.f32.mrf.mxu0
    %v295 = vadd.f32 %v98, %v294
    %v296 = vpop.f32.mrf.mxu0
    %297 = vmatprep.mubr.f32.mxu0 0.0
    %298 = vmatmul.mubr.f32.gmra.mxu0 %v164
    %v299 = vpop.f32.mrf.mxu0
    %v300 = vadd.f32 %v103, %v299
    %v301 = vpop.f32.mrf.mxu0
    %302 = vmatprep.mubr.f32.mxu0 0.0
    %303 = vmatmul.mubr.f32.gmra.mxu0 %v167
    %v304 = vpop.f32.mrf.mxu0
    %v305 = vadd.f32 %v108, %v304
    %v306 = vpop.f32.mrf.mxu0
    %307 = vmatprep.mubr.f32.mxu0 0.0
    %308 = vmatmul.mubr.f32.gmra.mxu0 %v170
    %v309 = vpop.f32.mrf.mxu0
    %v310 = vadd.f32 %v113, %v309
    %v311 = vpop.f32.mrf.mxu0
    %312 = vmatprep.mubr.f32.mxu0 0.0
    %313 = vmatmul.mubr.f32.gmra.mxu0 %v173
    %v314 = vpop.f32.mrf.mxu0
    %v315 = vadd.f32 %v118, %v314
    %v316 = vpop.f32.mrf.mxu0
    %317 = vmatprep.mubr.f32.mxu0 0.0
    %318 = vmatmul.mubr.f32.gmra.mxu0 %v176
    %v319 = vpop.f32.mrf.mxu0
    %v320 = vadd.f32 %v123, %v319
    %v321 = vpop.f32.mrf.mxu0
    %322 = vmatprep.mubr.f32.mxu0 0.0
    %323 = vmatmul.mubr.f32.gmra.mxu0 %v179
    %v324 = vpop.f32.mrf.mxu0
    %v325 = vadd.f32 %v128, %v324
    %v326 = vpop.f32.mrf.mxu0
    %327 = vmatprep.mubr.f32.mxu0 0.0
    %328 = vmatmul.mubr.f32.gmra.mxu0 %v182
    %v329 = vpop.f32.mrf.mxu0
    %v330 = vadd.f32 %v133, %v329
    %v331 = vpop.f32.mrf.mxu0
    %332 = vdwg.mxu0
    %v333 = vmax.f32 %v255, 0.0
    %v334 = vmax.f32 %v260, 0.0
    %v335 = vmax.f32 %v265, 0.0
    %v336 = vmax.f32 %v270, 0.0
    %v337 = vmax.f32 %v275, 0.0
    %v338 = vmax.f32 %v280, 0.0
    %v339 = vmax.f32 %v285, 0.0
    %v340 = vmax.f32 %v290, 0.0
    %v341 = vmax.f32 %v295, 0.0
    %v342 = vmax.f32 %v300, 0.0
    %v343 = vmax.f32 %v305, 0.0
    %v344 = vmax.f32 %v310, 0.0
    %v345 = vmax.f32 %v315, 0.0
    %v346 = vmax.f32 %v320, 0.0
    %v347 = vmax.f32 %v325, 0.0
    %v348 = vmax.f32 %v330, 0.0
    %v349 = vld [vmem:[%s3] sm:$0xff]
    %v350 = vld [vmem:[%s3 + $0x8] sm:$0xff]
    %v351 = vld [vmem:[%s3 + $0x10] sm:$0xff]
    %v352 = vld [vmem:[%s3 + $0x18] sm:$0xff]
    %v353 = vld [vmem:[%s3 + $0x20] sm:$0xff]
    %v354 = vld [vmem:[%s3 + $0x28] sm:$0xff]
    %v355 = vld [vmem:[%s3 + $0x30] sm:$0xff]
    %v356 = vld [vmem:[%s3 + $0x38] sm:$0xff]
    %v357 = vld [vmem:[%s3 + $0x40] sm:$0xff]
    %v358 = vld [vmem:[%s3 + $0x48] sm:$0xff]
    %v359 = vld [vmem:[%s3 + $0x50] sm:$0xff]
    %v360 = vld [vmem:[%s3 + $0x58] sm:$0xff]
    %v361 = vld [vmem:[%s3 + $0x60] sm:$0xff]
    %v362 = vld [vmem:[%s3 + $0x68] sm:$0xff]
    %v363 = vld [vmem:[%s3 + $0x70] sm:$0xff]
    %v364 = vld [vmem:[%s3 + $0x78] sm:$0xff]
    %366 = vset.pattern.permute.xlu0 0
    %367 = vperm.xlu0 %366, %v349
    %v368 = vpop.permute.xlu0 %367
    %371 = vset.pattern.permute.xlu0 0
    %372 = vperm.xlu0 %371, %v350
    %v373 = vpop.permute.xlu0 %372
    %376 = vset.pattern.permute.xlu0 0
    %377 = vperm.xlu0 %376, %v351
    %v378 = vpop.permute.xlu0 %377
    %381 = vset.pattern.permute.xlu0 0
    %382 = vperm.xlu0 %381, %v352
    %v383 = vpop.permute.xlu0 %382
    %386 = vset.pattern.permute.xlu0 0
    %387 = vperm.xlu0 %386, %v353
    %v388 = vpop.permute.xlu0 %387
    %391 = vset.pattern.permute.xlu0 0
    %392 = vperm.xlu0 %391, %v354
    %v393 = vpop.permute.xlu0 %392
    %396 = vset.pattern.permute.xlu0 0
    %397 = vperm.xlu0 %396, %v355
    %v398 = vpop.permute.xlu0 %397
    %401 = vset.pattern.permute.xlu0 0
    %402 = vperm.xlu0 %401, %v356
    %v403 = vpop.permute.xlu0 %402
    %406 = vset.pattern.permute.xlu0 0
    %407 = vperm.xlu0 %406, %v357
    %v408 = vpop.permute.xlu0 %407
    %411 = vset.pattern.permute.xlu0 0
    %412 = vperm.xlu0 %411, %v358
    %v413 = vpop.permute.xlu0 %412
    %416 = vset.pattern.permute.xlu0 0
    %417 = vperm.xlu0 %416, %v359
    %v418 = vpop.permute.xlu0 %417
    %421 = vset.pattern.permute.xlu0 0
    %422 = vperm.xlu0 %421, %v360
    %v423 = vpop.permute.xlu0 %422
    %426 = vset.pattern.permute.xlu0 0
    %427 = vperm.xlu0 %426, %v361
    %v428 = vpop.permute.xlu0 %427
    %431 = vset.pattern.permute.xlu0 0
    %432 = vperm.xlu0 %431, %v362
    %v433 = vpop.permute.xlu0 %432
    %436 = vset.pattern.permute.xlu0 0
    %437 = vperm.xlu0 %436, %v363
    %v438 = vpop.permute.xlu0 %437
    %441 = vset.pattern.permute.xlu0 0
    %442 = vperm.xlu0 %441, %v364
    %v443 = vpop.permute.xlu0 %442
    %v445 = vmul.f32 %v333, %v368
    %v446 = vmul.f32 %v334, %v373
    %v447 = vmul.f32 %v335, %v378
    %v448 = vmul.f32 %v336, %v383
    %v449 = vmul.f32 %v337, %v388
    %v450 = vmul.f32 %v338, %v393
    %v451 = vmul.f32 %v339, %v398
    %v452 = vmul.f32 %v340, %v403
    %v453 = vmul.f32 %v341, %v408
    %v454 = vmul.f32 %v342, %v413
    %v455 = vmul.f32 %v343, %v418
    %v456 = vmul.f32 %v344, %v423
    %v457 = vmul.f32 %v345, %v428
    %v458 = vmul.f32 %v346, %v433
    %v459 = vmul.f32 %v347, %v438
    %v460 = vmul.f32 %v348, %v443
    %v461 = vadd.f32 %v445, %v446
    %v462 = vadd.f32 %v461, %v447
    %v463 = vadd.f32 %v462, %v448
    %v464 = vadd.f32 %v463, %v449
    %v465 = vadd.f32 %v464, %v450
    %v466 = vadd.f32 %v465, %v451
    %v467 = vadd.f32 %v466, %v452
    %v468 = vadd.f32 %v467, %v453
    %v469 = vadd.f32 %v468, %v454
    %v470 = vadd.f32 %v469, %v455
    %v471 = vadd.f32 %v470, %v456
    %v472 = vadd.f32 %v471, %v457
    %v473 = vadd.f32 %v472, %v458
    %v474 = vadd.f32 %v473, %v459
    %v475 = vadd.f32 %v474, %v460
    %v476 = vrot.slane %v475, 4
    %v477 = vadd.f32 %v475, %v476
    %v478 = vrot.slane %v477, 2
    %v479 = vadd.f32 %v477, %v478
    %v480 = vrot.slane %v479, 1
    %v481 = vadd.f32 %v479, %v480
    %s482 = sld [smem:[#allocation2]]
    %v483 = vstv %s482
    %v484 = vadd.f32 %v481, %v483
    %485 = vst [vmem:[#allocation3] sm:$0x1] %v484
    // Predicated region
    $region22: #{tpu_custom_call.1} parent=1 // pred_check
      _
    $region23: #{tpu_custom_call.1} parent=1 // pred_check_branch
      %487 = sbr.rel (0) target = $region25
    $region24: #{tpu_custom_call.1} parent=1 // pred_region
      %s489 = ssub.s32 16, 16
      %490 = vsyncadd [#allocation4], %s489
      %s492 = sshll.u32 [#allocation3], 4
      %s493 = int_to_ptr.vmem [resolvable:$true] %s492
      %495 = dma.vmem_to_hbm [thread:$0]  %s493, 16, %s5, [#allocation4]
    $region25: #{tpu_custom_call.1} parent=1 // pred_fallthru
      _
    // Predicated region
    $region26: #{tpu_custom_call.1} parent=1 // pred_check
      _
    $region27: #{tpu_custom_call.1} parent=1 // pred_check_branch
      %497 = sbr.rel (0) target = $region29
    $region28: #{tpu_custom_call.1} parent=1 // pred_region
      %498 = dma.done [#allocation4], 16
    $region29: #{tpu_custom_call.1} parent=1 // pred_fallthru
      _
    %499 = vsyncpa [#allocation4], 1

</llo_original>
